<compile_context>
chip_gen: v7x
topology: tpu7x:2x2x1
jax: 0.10.0
libtpu: 0.0.40
codegen_flags: <defaults>
</compile_context>

<pallas_src>
import jax
import jax.numpy as jnp
from jax.experimental import pallas as pl
from jax.experimental.pallas import tpu as pltpu


def _round_up(x: int, m: int) -> int:
    return ((x + m - 1) // m) * m


def _sublane_align(dtype) -> int:
    """Second-minor block alignment: 8 rows for 4-byte, 16 for 2-byte, 32 for 1-byte."""
    itemsize = jnp.dtype(dtype).itemsize
    return max(8, 32 // max(itemsize, 1))


def _pick_tile(dim: int, max_tile: int, align: int) -> int:
    """Largest multiple of `align` <= max_tile that divides `dim` (no padding needed).
    Falls back to a clamped aligned tile (wrapper pads) when no divisor exists."""
    cap = min(max_tile, _round_up(dim, align))
    cap -= cap % align
    cap = max(cap, align)
    if dim % align == 0:
        t = cap
        while t >= align:
            if dim % t == 0:
                return t
            t -= align
    return cap


def _make_matmul_kernel(has_bias: bool):
    """x (tm,tk) @ w (tk,tn) with f32 accumulator; bias added once in the epilogue."""

    def _compute(x_ref, w_ref, b_ref, o_ref, acc_ref):
        k = pl.program_id(2)
        d = jnp.dot(x_ref[...], w_ref[...], preferred_element_type=jnp.float32)

        @pl.when(k == 0)
        def _():
            acc_ref[...] = d          # no separate zero-init store

        @pl.when(k > 0)
        def _():
            acc_ref[...] += d

        @pl.when(k == pl.num_programs(2) - 1)
        def _():
            acc = acc_ref[...]
            if has_bias:
                acc = acc + b_ref[...].astype(jnp.float32)  # (1,tn) broadcasts over rows
            o_ref[...] = acc.astype(o_ref.dtype)

    if has_bias:
        def kernel(x_ref, w_ref, b_ref, o_ref, acc_ref):
            _compute(x_ref, w_ref, b_ref, o_ref, acc_ref)
    else:
        def kernel(x_ref, w_ref, o_ref, acc_ref):
            _compute(x_ref, w_ref, None, o_ref, acc_ref)
    return kernel


_TINY_FLOP_THRESHOLD = 128 * 128 * 128  # below this a pallas_call is a net loss


def _tiled_matmul_bias(x2, w2, bias, *, tm=512, tn=512, tk=512):
    """x2: (M, K) @ w2: (K, N) (+ bias (N,)) -> (M, N) with f32 accumulation."""
    M, K = x2.shape
    Kw, N = w2.shape
    assert K == Kw
    out_dtype = x2.dtype

    # Tiny-problem fast path: per-grid-step overhead + pad/slice copies dominate.
    if M * K * N < _TINY_FLOP_THRESHOLD:
        out = jnp.dot(x2, w2, preferred_element_type=jnp.float32)
        if bias is not None:
            out = out + bias.astype(jnp.float32)
        return out.astype(out_dtype)

    sub = _sublane_align(out_dtype)          # 8 (f32) / 16 (bf16) / 32 (int8, fp8)
    tm = _pick_tile(M, tm, sub)
    Mp = _round_up(M, tm)
    # v7x has 2 TensorCores: if M is a single block (decode-sized B*T), shrink tn
    # so the parallel N axis provides >=2 blocks to shard across cores.
    if Mp // tm == 1 and N > 256:
        tn = min(tn, 256)
    tn = _pick_tile(N, tn, 128)
    tk = _pick_tile(K, tk, 128)
    Np = _round_up(N, tn)
    Kp = _round_up(K, tk)

    # Padding only happens when no divisor tile exists (odd dims); zero K-padding
    # contributes nothing to the accumulation.
    if (Mp, Kp) != (M, K):
        x2 = jnp.pad(x2, ((0, Mp - M), (0, Kp - K)))
    if (Kp, Np) != (K, N):
        w2 = jnp.pad(w2, ((0, Kp - K), (0, Np - N)))

    has_bias = bias is not None
    inputs = [x2, w2]
    in_specs = [pl.BlockSpec((tm, tk), lambda i, j, k: (i, k)),
                pl.BlockSpec((tk, tn), lambda i, j, k: (k, j))]
    if has_bias:
        b2 = bias.reshape(1, N)
        if Np != N:
            b2 = jnp.pad(b2, ((0, 0), (0, Np - N)))
        inputs.append(b2)
        in_specs.append(pl.BlockSpec((1, tn), lambda i, j, k: (0, j)))

    itemsize = jnp.dtype(out_dtype).itemsize
    cost = pl.CostEstimate(
        flops=2 * M * N * K,
        transcendentals=0,
        bytes_accessed=(M * K + K * N + M * N + (N if has_bias else 0)) * itemsize,
    )

    out = pl.pallas_call(
        _make_matmul_kernel(has_bias),
        out_shape=jax.ShapeDtypeStruct((Mp, Np), out_dtype),
        grid_spec=pltpu.PrefetchScalarGridSpec(
            num_scalar_prefetch=0,
            grid=(Mp // tm, Np // tn, Kp // tk),
            in_specs=in_specs,
            out_specs=pl.BlockSpec((tm, tn), lambda i, j, k: (i, j)),
            scratch_shapes=[pltpu.VMEM((tm, tn), jnp.float32)],
        ),
        compiler_params=pltpu.CompilerParams(
            dimension_semantics=("parallel", "parallel", "arbitrary"),
            vmem_limit_bytes=32 * 1024 * 1024,
        ),
        cost_estimate=cost,
    )(*inputs)

    if (Mp, Np) != (M, N):
        out = out[:M, :N]
    return out


def attention_projection(x, w, b, *, is_output_projection: bool):
    """Pallas-backed equivalent of AttentionProjection.forward.

    w: (input_dim, num_heads, dim_per_head)
    b: (input_dim,) if output projection else (num_heads, dim_per_head); may be None.
    """
    D, N, H = w.shape
    if is_output_projection:
        # einsum 'btnh,dnh->btd'  ==  x[B*T, N*H] @ w[N*H, D]
        B, T, n, h = x.shape
        assert (n, h) == (N, H)
        x2 = x.reshape(B * T, N * H)
        # Transpose the weight ONCE in HBM so the kernel only ever sees a native
        # (K, N) RHS layout -> no per-tile transpose/relayout inside the kernel.
        w2 = w.reshape(D, N * H).T
        bias = None if b is None else b.reshape(D)
        out2 = _tiled_matmul_bias(x2, w2, bias)
        return out2.reshape(B, T, D)
    else:
        # einsum 'btd,dnh->btnh'  ==  x[B*T, D] @ w[D, N*H]
        B, T, d = x.shape
        assert d == D
        x2 = x.reshape(B * T, D)
        w2 = w.reshape(D, N * H)
        bias = None if b is None else b.reshape(N * H)
        out2 = _tiled_matmul_bias(x2, w2, bias)
        return out2.reshape(B, T, N, H)


if __name__ == "__main__":
    key = jax.random.PRNGKey(0)

    # ---------- small shapes mirroring the module defaults (fast path) ----------
    B, T, D, N, H = 2, 8, 32, 4, 8  # input_dim=32, num_heads=4, dim_per_head=8
    k_w, k_x_in, k_x_out, k_rest = jax.random.split(key, 4)

    w = jax.random.normal(k_w, (D, N, H), dtype=jnp.float32)
    b_in = jnp.zeros((N, H), dtype=jnp.float32)   # torch.zeros init
    b_out = jnp.zeros((D,), dtype=jnp.float32)

    # input projection: (B, T, D) -> (B, T, N, H)
    x_in = jax.random.normal(k_x_in, (B, T, D), dtype=jnp.float32)
    y_in = jax.block_until_ready(
        attention_projection(x_in, w, b_in, is_output_projection=False))
    ref_in = jnp.einsum("btd,dnh->btnh", x_in, w) + b_in
    assert y_in.shape == (B, T, N, H)
    assert jnp.allclose(y_in, ref_in, atol=1e-4, rtol=1e-4)

    # output projection: (B, T, N, H) -> (B, T, D)
    x_out = jax.random.normal(k_x_out, (B, T, N, H), dtype=jnp.float32)
    y_out = jax.block_until_ready(
        attention_projection(x_out, w, b_out, is_output_projection=True))
    ref_out = jnp.einsum("btnh,dnh->btd", x_out, w) + b_out
    assert y_out.shape == (B, T, D)
    assert jnp.allclose(y_out, ref_out, atol=1e-4, rtol=1e-4)

    # no-bias path (use_bias=False)
    y_nb = jax.block_until_ready(
        attention_projection(x_in, w, None, is_output_projection=False))
    assert jnp.allclose(y_nb, jnp.einsum("btd,dnh->btnh", x_in, w), atol=1e-4, rtol=1e-4)

    # ---------- larger shapes exercising the tiled Pallas kernel path ----------
    B2, T2, D2, N2, H2 = 2, 64, 768, 8, 64
    k_w2, k_b1, k_b2, k_xi, k_xo = jax.random.split(k_rest, 5)
    w_big = jax.random.normal(k_w2, (D2, N2, H2), dtype=jnp.float32)
    b_in_big = jax.random.normal(k_b1, (N2, H2), dtype=jnp.float32)
    b_out_big = jax.random.normal(k_b2, (D2,), dtype=jnp.float32)

    xi = jax.random.normal(k_xi, (B2, T2, D2), dtype=jnp.float32)
    yi = jax.block_until_ready(
        attention_projection(xi, w_big, b_in_big, is_output_projection=False))
    ref_i = jnp.einsum("btd,dnh->btnh", xi, w_big) + b_in_big
    assert yi.shape == (B2, T2, N2, H2)
    assert jnp.allclose(yi, ref_i, atol=2e-2, rtol=2e-2)

    xo = jax.random.normal(k_xo, (B2, T2, N2, H2), dtype=jnp.float32)
    yo = jax.block_until_ready(
        attention_projection(xo, w_big, b_out_big, is_output_projection=True))
    ref_o = jnp.einsum("btnh,dnh->btd", xo, w_big) + b_out_big
    assert yo.shape == (B2, T2, D2)
    assert jnp.allclose(yo, ref_o, atol=2e-2, rtol=2e-2)

    # ---------- bf16 operands into the MXU (f32 accumulation) ----------
    xi_bf = xi.astype(jnp.bfloat16)
    w_bf = w_big.astype(jnp.bfloat16)
    b_bf = b_in_big.astype(jnp.bfloat16)
    yi_bf = jax.block_until_ready(
        attention_projection(xi_bf, w_bf, b_bf, is_output_projection=False))
    ref_bf = (jnp.einsum("btd,dnh->btnh", xi_bf.astype(jnp.float32),
                         w_bf.astype(jnp.float32))
              + b_bf.astype(jnp.float32))
    assert yi_bf.shape == (B2, T2, N2, H2)
    assert jnp.allclose(yi_bf.astype(jnp.float32), ref_bf, atol=5e-1, rtol=5e-2)

    print("KERNEL_OK")
</pallas_src>

<mosaic_0001>
module attributes {stable_mosaic.version = 11 : i64} {
  func.func @kernel(%arg0: i32, %arg1: i32, %arg2: i32, %arg3: memref<128x384xf32, #tpu.memory_space<vmem>>, %arg4: memref<384x256xf32, #tpu.memory_space<vmem>>, %arg5: memref<1x256xf32, #tpu.memory_space<vmem>>, %arg6: memref<128x256xf32, #tpu.memory_space<vmem>>, %arg7: memref<128x256xf32, #tpu.memory_space<vmem>>) attributes {dimension_semantics = [#tpu.dimension_semantics<parallel>, #tpu.dimension_semantics<parallel>, #tpu.dimension_semantics<arbitrary>], iteration_bounds = array<i64: 1, 2, 2>, scalar_prefetch = 0 : i64, scratch_operands = 1 : i64, tpu.core_type = #tpu.core_type<tc>, window_params = [{transform_indices = @transform_0, window_bounds = array<i64: 128, 384>}, {transform_indices = @transform_1, window_bounds = array<i64: 384, 256>}, {transform_indices = @transform_2, window_bounds = array<i64: 1, 256>}, {transform_indices = @transform_3, window_bounds = array<i64: 128, 256>}]} {
    %c0 = arith.constant 0 : index
    %c0_0 = arith.constant 0 : index
    %0 = vector.load %arg3[%c0, %c0_0] : memref<128x384xf32, #tpu.memory_space<vmem>>, vector<128x384xf32>
    %c0_1 = arith.constant 0 : index
    %c0_2 = arith.constant 0 : index
    %1 = vector.load %arg4[%c0_1, %c0_2] : memref<384x256xf32, #tpu.memory_space<vmem>>, vector<384x256xf32>
    %cst = arith.constant dense<0.000000e+00> : vector<128x256xf32>
    %2 = tpu.matmul %0, %1, %cst {dimension_numbers = #tpu.dot_dimension_numbers<[1], [0], [0], [1], [0, 0, 1, 1], [], []>} : vector<128x384xf32>, vector<384x256xf32>, vector<128x256xf32> -> vector<128x256xf32>
    %c0_i32 = arith.constant 0 : i32
    %3 = arith.cmpi eq, %arg2, %c0_i32 : i32
    %4 = arith.extui %3 : i1 to i32
    %c0_i32_3 = arith.constant 0 : i32
    %5 = arith.cmpi ne, %4, %c0_i32_3 : i32
    scf.if %5 {
      %c0_7 = arith.constant 0 : index
      %c0_8 = arith.constant 0 : index
      %12 = vector.load %arg7[%c0_7, %c0_8] : memref<128x256xf32, #tpu.memory_space<vmem>>, vector<128x256xf32>
      tpu.vector_store %arg7[%c0_7, %c0_8], %2 {strides = array<i32>} : memref<128x256xf32, #tpu.memory_space<vmem>>, vector<128x256xf32>,
    } else {
    }
    %c0_i32_4 = arith.constant 0 : i32
    %6 = arith.cmpi sgt, %arg2, %c0_i32_4 : i32
    %7 = arith.extui %6 : i1 to i32
    %c0_i32_5 = arith.constant 0 : i32
    %8 = arith.cmpi ne, %7, %c0_i32_5 : i32
    scf.if %8 {
      %c0_7 = arith.constant 0 : index
      %c0_8 = arith.constant 0 : index
      %12 = vector.load %arg7[%c0_7, %c0_8] : memref<128x256xf32, #tpu.memory_space<vmem>>, vector<128x256xf32>
      %13 = arith.addf %12, %2 : vector<128x256xf32>
      %c0_9 = arith.constant 0 : index
      %c0_10 = arith.constant 0 : index
      %14 = vector.load %arg7[%c0_9, %c0_10] : memref<128x256xf32, #tpu.memory_space<vmem>>, vector<128x256xf32>
      tpu.vector_store %arg7[%c0_9, %c0_10], %13 {strides = array<i32>} : memref<128x256xf32, #tpu.memory_space<vmem>>, vector<128x256xf32>,
    } else {
    }
    %c1_i32 = arith.constant 1 : i32
    %9 = arith.cmpi eq, %arg2, %c1_i32 : i32
    %10 = arith.extui %9 : i1 to i32
    %c0_i32_6 = arith.constant 0 : i32
    %11 = arith.cmpi ne, %10, %c0_i32_6 : i32
    scf.if %11 {
      %c0_7 = arith.constant 0 : index
      %c0_8 = arith.constant 0 : index
      %12 = vector.load %arg7[%c0_7, %c0_8] : memref<128x256xf32, #tpu.memory_space<vmem>>, vector<128x256xf32>
      %c0_9 = arith.constant 0 : index
      %c0_10 = arith.constant 0 : index
      %13 = vector.load %arg5[%c0_9, %c0_10] : memref<1x256xf32, #tpu.memory_space<vmem>>, vector<1x256xf32>
      %14 = vector.broadcast %13 : vector<1x256xf32> to vector<128x256xf32>
      %15 = arith.addf %12, %14 : vector<128x256xf32>
      %c0_11 = arith.constant 0 : index
      %c0_12 = arith.constant 0 : index
      %16 = vector.load %arg6[%c0_11, %c0_12] : memref<128x256xf32, #tpu.memory_space<vmem>>, vector<128x256xf32>
      tpu.vector_store %arg6[%c0_11, %c0_12], %15 {strides = array<i32>} : memref<128x256xf32, #tpu.memory_space<vmem>>, vector<128x256xf32>,
    } else {
    }
    return
  }
  func.func @transform_0(%arg0: i32, %arg1: i32, %arg2: i32) -> (i32, i32) {
    %c0_i32 = arith.constant 0 : i32
    return %arg0, %arg2 : i32, i32
  }
  func.func @transform_1(%arg0: i32, %arg1: i32, %arg2: i32) -> (i32, i32) {
    %c0_i32 = arith.constant 0 : i32
    return %arg2, %arg1 : i32, i32
  }
  func.func @transform_2(%arg0: i32, %arg1: i32, %arg2: i32) -> (i32, i32) {
    %c0_i32 = arith.constant 0 : i32
    %c0_i32_0 = arith.constant 0 : i32
    return %c0_i32, %arg1 : i32, i32
  }
  func.func @transform_3(%arg0: i32, %arg1: i32, %arg2: i32) -> (i32, i32) {
    %c0_i32 = arith.constant 0 : i32
    return %arg0, %arg1 : i32, i32
  }
}

</mosaic_0001>

<llo_original>
// kernel: tpu_custom_call.1
$region0: #{tpu_custom_call.1}
  #allocation0 [shape = 'u32[]', space=smem, size = 0x4, offset = 0x4, fixed_abs, tag = 'smem constant byte address 0x4 - core index']
  #allocation1 [shape = 'u32[144,128]{1,0:T(1,128)}', space=vmem, size = 0x12000, scoped, tag = 'internal scratch']
  #allocation2 [shape = 'f32[128,256]{1,0:T(8,128)}', space=vmem, size = 0x20000, scoped, tag = 'scratch operand']
  %s0 = inlined_call_operand.hbm [shape: f32[128,768], index: 0, kind: input, shape index: {}]
  %s1 = inlined_call_operand.hbm [shape: f32[768,512], index: 1, kind: input, shape index: {}]
  %s2 = inlined_call_operand.hbm [shape: f32[1,512], index: 2, kind: input, shape index: {}]
  %s3 = inlined_call_operand.hbm [shape: f32[128,512], index: 3, kind: output, shape index: {}]
  %s4 = sld [smem:[#allocation0]]
  $region69: #{tpu_custom_call.1} parent=0
    _
  %s6 = ssub.s32 1, %s4
  %s7 = scalar_select 0, %s6, %s4
  $region1: #{tpu_custom_call.1} parent=0
    #allocation3 [shape = 'u8[393216]{0}', space=vmem, size = 0x60000, scoped, tag = 'input window, operand 0']
    #allocation4 [shape = 's32[2]{0}', space=sflag, size = 0x8, scoped, tag = 'scoped memory for tpu_custom_call.1']
    #allocation5 [shape = 's32[2]{0}', space=sflag, size = 0x8, scoped, tag = 'scoped memory for tpu_custom_call.1']
    #allocation6 [shape = 'u8[786432]{0}', space=vmem, size = 0xc0000, scoped, tag = 'input window, operand 1']
    #allocation7 [shape = 's32[2]{0}', space=sflag, size = 0x8, scoped, tag = 'scoped memory for tpu_custom_call.1']
    #allocation8 [shape = 'u8[2048]{0}', space=vmem, size = 0x800, scoped, tag = 'input window, operand 2']
    #allocation9 [shape = 'u8[262144]{0}', space=vmem, size = 0x40000, scoped, tag = 'output window, operand 0']
    %8 = vsyncpa [#allocation4], 0
    %s9 = scalar_lea.sflag [#allocation4], 1
    %10 = vsyncpa %s9, 0
    %11 = vsyncpa [#allocation7], 0
    %s12 = scalar_lea.sflag [#allocation7], 1
    %13 = vsyncpa %s12, 0
    %14 = vsyncpa [#allocation5], 0
    %s15 = scalar_lea.sflag [#allocation5], 1
    %16 = vsyncpa %s15, 0
    loop: start=0, step=1, limit=6
    $region2: #{tpu_custom_call.1} parent=1 // loop_pre_header
      _
    $region3: #{tpu_custom_call.1} parent=1 // loop_header
      %s18 = sphi 0, %s22
      %p19 = scmp.ge.s32.totalorder %s18, 6
      %s25 = sphi 0, %s44
      %s26 = sphi 0, %s40
      %s27 = sphi 0, %s36
      %s28 = sphi 0, %s25
      %s29 = sphi 0, %s26
      %s30 = sphi 0, %s27
      %s31 = sphi 0, %s28
      %s32 = sphi 0, %s29
      %s33 = sphi 0, %s30
      %s49 = sphi 0, %s51
      %s52 = sphi 0, %s49
      %s53 = sphi 0, %s52
      %s69 = sphi 0, %s53
      %s77 = sphi 0, %s79
      %s80 = sphi 0, %s77
      %s81 = sphi 0, %s80
      %s97 = sphi 0, %s81
      %s103 = sphi 0, %s105
      %s106 = sphi 0, %s103
      %s107 = sphi 0, %s106
      %s123 = sphi 0, %s107
      %s131 = sphi 0, %s133
      %s134 = sphi 0, %s131
      %s135 = sphi 0, %s134
      %s151 = sphi 0, %s135
    $region4: #{tpu_custom_call.1} parent=1 // loop_header_branch
      %21 = sbr.rel (%p19) target = $region8
    $region5: #{tpu_custom_call.1} parent=1 // loop_body
      %s23 = ssub.s32 %s18, 1
      %s24 = ssub.s32 %s18, 2
      %s34 = sadd.s32 1, %s27
      %p35 = scmp.ge.s32.totalorder %s34, 2
      %s36 = scalar_select %p35, 0, %s34
      %s37 = sadd.s32 1, %s26
      %s38 = scalar_select %p35, %s37, %s26
      %p39 = scmp.ge.s32.totalorder %s38, 2
      %s40 = scalar_select %p39, 0, %s38
      %s41 = sadd.s32 1, %s25
      %s42 = scalar_select %p39, %s41, %s25
      %p43 = scmp.ge.s32.totalorder %s42, 1
      %s44 = scalar_select %p43, 0, %s42
      %s45 = ssub.s32 %s25, %s44
      %s46 = ssub.s32 %s27, %s36
      %s47 = sor.u32 %s45, %s46
      %p48 = scmp.eq.s32.totalorder %s47, 0
      %s50 = sadd.s32 %s49, 1
      %s51 = scalar_select %p48, %s49, %s50
      %p54 = pneg %p48
      %p55 = scmp.eq.s32.totalorder %s18, 3
      %p56 = por %p54, %p55
      %p57 = scmp.ne.s32.totalorder %s49, %s52
      %p58 = scmp.eq.s32.totalorder %s18, 0
      %p59 = por %p57, %p58
      %p60 = scmp.ne.s32.totalorder %s49, %s52
      %p61 = scmp.eq.s32.totalorder %s23, 3
      %p62 = por %p60, %p61
      %p63 = scmp.ne.s32.totalorder %s52, %s53
      %p64 = scmp.eq.s32.totalorder %s23, 0
      %p65 = por %p63, %p64
      %p66 = scmp.ne.s32.totalorder %s52, %s53
      %p67 = scmp.eq.s32.totalorder %s24, 3
      %p68 = por %p66, %p67
      %p70 = scmp.ne.s32.totalorder %s53, %s69
      %p71 = scmp.eq.s32.totalorder %s24, 0
      %p72 = por %p70, %p71
      %s73 = ssub.s32 %s27, %s36
      %s74 = ssub.s32 %s26, %s40
      %s75 = sor.u32 %s73, %s74
      %p76 = scmp.eq.s32.totalorder %s75, 0
      %s78 = sadd.s32 %s77, 1
      %s79 = scalar_select %p76, %s77, %s78
      %p82 = pneg %p76
      %p83 = scmp.eq.s32.totalorder %s18, 3
      %p84 = por %p82, %p83
      %p85 = scmp.ne.s32.totalorder %s77, %s80
      %p86 = scmp.eq.s32.totalorder %s18, 0
      %p87 = por %p85, %p86
      %p88 = scmp.ne.s32.totalorder %s77, %s80
      %p89 = scmp.eq.s32.totalorder %s23, 3
      %p90 = por %p88, %p89
      %p91 = scmp.ne.s32.totalorder %s80, %s81
      %p92 = scmp.eq.s32.totalorder %s23, 0
      %p93 = por %p91, %p92
      %p94 = scmp.ne.s32.totalorder %s80, %s81
      %p95 = scmp.eq.s32.totalorder %s24, 3
      %p96 = por %p94, %p95
      %p98 = scmp.ne.s32.totalorder %s81, %s97
      %p99 = scmp.eq.s32.totalorder %s24, 0
      %p100 = por %p98, %p99
      %s101 = ssub.s32 %s26, %s40
      %p102 = scmp.eq.s32.totalorder %s101, 0
      %s104 = sadd.s32 %s103, 1
      %s105 = scalar_select %p102, %s103, %s104
      %p108 = pneg %p102
      %p109 = scmp.eq.s32.totalorder %s18, 3
      %p110 = por %p108, %p109
      %p111 = scmp.ne.s32.totalorder %s103, %s106
      %p112 = scmp.eq.s32.totalorder %s18, 0
      %p113 = por %p111, %p112
      %p114 = scmp.ne.s32.totalorder %s103, %s106
      %p115 = scmp.eq.s32.totalorder %s23, 3
      %p116 = por %p114, %p115
      %p117 = scmp.ne.s32.totalorder %s106, %s107
      %p118 = scmp.eq.s32.totalorder %s23, 0
      %p119 = por %p117, %p118
      %p120 = scmp.ne.s32.totalorder %s106, %s107
      %p121 = scmp.eq.s32.totalorder %s24, 3
      %p122 = por %p120, %p121
      %p124 = scmp.ne.s32.totalorder %s107, %s123
      %p125 = scmp.eq.s32.totalorder %s24, 0
      %p126 = por %p124, %p125
      %s127 = ssub.s32 %s25, %s44
      %s128 = ssub.s32 %s26, %s40
      %s129 = sor.u32 %s127, %s128
      %p130 = scmp.eq.s32.totalorder %s129, 0
      %s132 = sadd.s32 %s131, 1
      %s133 = scalar_select %p130, %s131, %s132
      %p136 = pneg %p130
      %p137 = scmp.eq.s32.totalorder %s18, 3
      %p138 = por %p136, %p137
      %p139 = scmp.ne.s32.totalorder %s131, %s134
      %p140 = scmp.eq.s32.totalorder %s18, 0
      %p141 = por %p139, %p140
      %p142 = scmp.ne.s32.totalorder %s131, %s134
      %p143 = scmp.eq.s32.totalorder %s23, 3
      %p144 = por %p142, %p143
      %p145 = scmp.ne.s32.totalorder %s134, %s135
      %p146 = scmp.eq.s32.totalorder %s23, 0
      %p147 = por %p145, %p146
      %p148 = scmp.ne.s32.totalorder %s134, %s135
      %p149 = scmp.eq.s32.totalorder %s24, 3
      %p150 = por %p148, %p149
      %p152 = scmp.ne.s32.totalorder %s135, %s151
      %p153 = scmp.eq.s32.totalorder %s24, 0
      %p154 = por %p152, %p153
      %p155 = scmp.le.s32.totalorder 1, %s18
      %p156 = scmp.lt.s32.totalorder %s18, 5
      %p157 = pnand %p155, %p156
      %p158 = pneg %p157
      // Predicated region
      $region9: #{tpu_custom_call.1} parent=5 // pred_check
        _
      $region10: #{tpu_custom_call.1} parent=5 // pred_check_branch
        %160 = sbr.rel (%p157) target = $region12
      $region11: #{tpu_custom_call.1} parent=5 // pred_region
        %s161 = ssub.s32 %s18, 1
      $region12: #{tpu_custom_call.1} parent=5 // pred_fallthru
        _
      %p162 = scmp.lt.s32.totalorder %s18, 4
      // Predicated region
      $region13: #{tpu_custom_call.1} parent=5 // pred_check
        %p163 = pneg %p162
      $region14: #{tpu_custom_call.1} parent=5 // pred_check_branch
        %165 = sbr.rel (%p163) target = $region16
      $region15: #{tpu_custom_call.1} parent=5 // pred_region
        // Predicated region
        $region17: #{tpu_custom_call.1} parent=15 // pred_check
          %p166 = pneg %p59
        $region18: #{tpu_custom_call.1} parent=15 // pred_check_branch
          %168 = sbr.rel (%p166) target = $region20
        $region19: #{tpu_custom_call.1} parent=15 // pred_region
          %s169 = sand.u32 %s49, 1
          %s170 = scalar_lea.sflag [#allocation4], %s169
          %s171 = sand.u32 %s49, 1
          %s172 = smul.addr %s171, 384
          %s173 = scalar_lea.vmem [#allocation3], %s172
          %s174 = smul.u32 16, %s25
          %s175 = smul.u32 3, %s27
          %s177 = ssub.s32 6144, 6144
          %178 = vsyncadd %s170, %s177
          %s179 = smul.addr %s174, 6
          %s180 = sadd.s32 %s175, %s179
          %s181 = smul.addr %s180, 128
          %s182 = scalar_lea.hbm %s0, %s181
          %s183 = sshll.u32 %s173, 4
          %s184 = int_to_ptr.vmem [resolvable:$true] %s183
          %189 = dma.hbm_to_vmem [thread:$0]  %s182, 6144, %s184, %s170, 768, 384, 24
        $region20: #{tpu_custom_call.1} parent=15 // pred_fallthru
          _
        // Predicated region
        $region21: #{tpu_custom_call.1} parent=15 // pred_check
          %p190 = pneg %p87
        $region22: #{tpu_custom_call.1} parent=15 // pred_check_branch
          %192 = sbr.rel (%p190) target = $region24
        $region23: #{tpu_custom_call.1} parent=15 // pred_region
          %s193 = sand.u32 %s18, 1
          %s194 = scalar_lea.sflag [#allocation7], %s193
          %s195 = sand.u32 %s77, 1
          %s196 = smul.addr %s195, 768
          %s197 = scalar_lea.vmem [#allocation6], %s196
          %s198 = smul.u32 48, %s27
          %s199 = smul.u32 2, %s26
          %s201 = ssub.s32 12288, 12288
          %202 = vsyncadd %s194, %s201
          %s203 = smul.addr %s198, 4
          %s204 = sadd.s32 %s199, %s203
          %s205 = smul.addr %s204, 128
          %s206 = scalar_lea.hbm %s1, %s205
          %s207 = sshll.u32 %s197, 4
          %s208 = int_to_ptr.vmem [resolvable:$true] %s207
          %213 = dma.hbm_to_vmem [thread:$0]  %s206, 12288, %s208, %s194, 512, 256, 16
        $region24: #{tpu_custom_call.1} parent=15 // pred_fallthru
          _
        // Predicated region
        $region25: #{tpu_custom_call.1} parent=15 // pred_check
          %p214 = pneg %p113
        $region26: #{tpu_custom_call.1} parent=15 // pred_check_branch
          %216 = sbr.rel (%p214) target = $region28
        $region27: #{tpu_custom_call.1} parent=15 // pred_region
          %s217 = sand.u32 %s18, 1
          %s218 = scalar_lea.sflag [#allocation7], %s217
          %s219 = sand.u32 %s103, 1
          %s220 = smul.addr %s219, 2
          %s221 = scalar_lea.vmem [#allocation8], %s220
          %s222 = smul.u32 2, %s26
          %s224 = ssub.s32 32, 32
          %225 = vsyncadd %s218, %s224
          %s226 = smul.addr %s222, 16
          %s227 = scalar_lea.hbm %s2, %s226
          %s229 = sshll.u32 %s221, 4
          %s230 = int_to_ptr.vmem [resolvable:$true] %s229
          %232 = dma.hbm_to_vmem [thread:$0]  %s227, 32, %s230, %s218
        $region28: #{tpu_custom_call.1} parent=15 // pred_fallthru
          _
      $region16: #{tpu_custom_call.1} parent=5 // pred_fallthru
        _
      %p233 = scmp.le.s32.totalorder 1, %s18
      %p234 = scmp.lt.s32.totalorder %s18, 5
      %p235 = pnand %p233, %p234
      %p236 = pneg %p235
      // Predicated region
      $region29: #{tpu_custom_call.1} parent=5 // pred_check
        _
      $region30: #{tpu_custom_call.1} parent=5 // pred_check_branch
        %238 = sbr.rel (%p235) target = $region32
      $region31: #{tpu_custom_call.1} parent=5 // pred_region
        %s239 = ssub.s32 %s18, 1
        %s240 = sand.u32 %s52, 1
        %s241 = scalar_lea.sflag [#allocation4], %s240
        %s242 = sand.u32 %s52, 1
        %s243 = smul.addr %s242, 384
        %s244 = scalar_lea.vmem [#allocation3], %s243
        // Predicated region
        $region33: #{tpu_custom_call.1} parent=31 // pred_check
          %p245 = pneg %p65
        $region34: #{tpu_custom_call.1} parent=31 // pred_check_branch
          %247 = sbr.rel (%p245) target = $region36
        $region35: #{tpu_custom_call.1} parent=31 // pred_region
          %248 = dma.done %s241, 6144
        $region36: #{tpu_custom_call.1} parent=31 // pred_fallthru
          _
        %s249 = sand.u32 %s23, 1
        %s250 = scalar_lea.sflag [#allocation7], %s249
        %s251 = sand.u32 %s80, 1
        %s252 = smul.addr %s251, 768
        %s253 = scalar_lea.vmem [#allocation6], %s252
        // Predicated region
        $region37: #{tpu_custom_call.1} parent=31 // pred_check
          %p254 = pneg %p93
        $region38: #{tpu_custom_call.1} parent=31 // pred_check_branch
          %256 = sbr.rel (%p254) target = $region40
        $region39: #{tpu_custom_call.1} parent=31 // pred_region
          %257 = dma.done %s250, 12288
        $region40: #{tpu_custom_call.1} parent=31 // pred_fallthru
          _
        %s258 = sand.u32 %s23, 1
        %s259 = scalar_lea.sflag [#allocation7], %s258
        %s260 = sand.u32 %s106, 1
        %s261 = smul.addr %s260, 2
        %s262 = scalar_lea.vmem [#allocation8], %s261
        // Predicated region
        $region41: #{tpu_custom_call.1} parent=31 // pred_check
          %p263 = pneg %p119
        $region42: #{tpu_custom_call.1} parent=31 // pred_check_branch
          %265 = sbr.rel (%p263) target = $region44
        $region43: #{tpu_custom_call.1} parent=31 // pred_region
          %266 = dma.done %s259, 32
        $region44: #{tpu_custom_call.1} parent=31 // pred_fallthru
          _
        %s267 = sand.u32 %s52, 1
        %s268 = scalar_lea.sflag [#allocation4], %s267
        %s269 = sand.u32 %s52, 1
        %s270 = smul.addr %s269, 384
        %s271 = scalar_lea.vmem [#allocation3], %s270
        %p272 = pneg %p65
        %p273 = pneg %p62
        %s274 = sand.u32 %s23, 1
        %s275 = scalar_lea.sflag [#allocation7], %s274
        %s276 = sand.u32 %s80, 1
        %s277 = smul.addr %s276, 768
        %s278 = scalar_lea.vmem [#allocation6], %s277
        %p279 = pneg %p93
        %p280 = pneg %p90
        %s281 = sand.u32 %s23, 1
        %s282 = scalar_lea.sflag [#allocation7], %s281
        %s283 = sand.u32 %s106, 1
        %s284 = smul.addr %s283, 2
        %s285 = scalar_lea.vmem [#allocation8], %s284
        %p286 = pneg %p119
        %p287 = pneg %p116
        %p288 = pneg %p147
        %p289 = pneg %p144
        %s290 = sand.u32 %s134, 1
        %s291 = scalar_lea.sflag [#allocation5], %s290
        %s292 = sand.u32 %s134, 1
        %s293 = smul.addr %s292, 256
        %s294 = scalar_lea.vmem [#allocation9], %s293
        %s295 = smul.u32 16, %s28
        %s296 = smul.u32 3, %s30
        %s297 = smul.u32 48, %s30
        %s298 = smul.u32 2, %s29
        %s299 = smul.u32 2, %s29
        %s300 = smul.u32 16, %s28
        %s301 = smul.u32 2, %s29
        %v302 = vld [vmem:[%s244] sm:$0xff]
        %v303 = vld [vmem:[%s244 + $0x8] sm:$0xff]
        %v304 = vld [vmem:[%s244 + $0x10] sm:$0xff]
        %v305 = vld [vmem:[%s244 + $0x18] sm:$0xff]
        %v306 = vld [vmem:[%s244 + $0x20] sm:$0xff]
        %v307 = vld [vmem:[%s244 + $0x28] sm:$0xff]
        %v308 = vld [vmem:[%s244 + $0x30] sm:$0xff]
        %v309 = vld [vmem:[%s244 + $0x38] sm:$0xff]
        %v310 = vld [vmem:[%s244 + $0x40] sm:$0xff]
        %v311 = vld [vmem:[%s244 + $0x48] sm:$0xff]
        %v312 = vld [vmem:[%s244 + $0x50] sm:$0xff]
        %v313 = vld [vmem:[%s244 + $0x58] sm:$0xff]
        %v314 = vld [vmem:[%s244 + $0x60] sm:$0xff]
        %v315 = vld [vmem:[%s244 + $0x68] sm:$0xff]
        %v316 = vld [vmem:[%s244 + $0x70] sm:$0xff]
        %v317 = vld [vmem:[%s244 + $0x78] sm:$0xff]
        %v318 = vld [vmem:[%s244 + $0x80] sm:$0xff]
        %v319 = vld [vmem:[%s244 + $0x88] sm:$0xff]
        %v320 = vld [vmem:[%s244 + $0x90] sm:$0xff]
        %v321 = vld [vmem:[%s244 + $0x98] sm:$0xff]
        %v322 = vld [vmem:[%s244 + $0xa0] sm:$0xff]
        %v323 = vld [vmem:[%s244 + $0xa8] sm:$0xff]
        %v324 = vld [vmem:[%s244 + $0xb0] sm:$0xff]
        %v325 = vld [vmem:[%s244 + $0xb8] sm:$0xff]
        %v326 = vld [vmem:[%s244 + $0xc0] sm:$0xff]
        %v327 = vld [vmem:[%s244 + $0xc8] sm:$0xff]
        %v328 = vld [vmem:[%s244 + $0xd0] sm:$0xff]
        %v329 = vld [vmem:[%s244 + $0xd8] sm:$0xff]
        %v330 = vld [vmem:[%s244 + $0xe0] sm:$0xff]
        %v331 = vld [vmem:[%s244 + $0xe8] sm:$0xff]
        %v332 = vld [vmem:[%s244 + $0xf0] sm:$0xff]
        %v333 = vld [vmem:[%s244 + $0xf8] sm:$0xff]
        %v334 = vld [vmem:[%s244 + $0x100] sm:$0xff]
        %v335 = vld [vmem:[%s244 + $0x108] sm:$0xff]
        %v336 = vld [vmem:[%s244 + $0x110] sm:$0xff]
        %v337 = vld [vmem:[%s244 + $0x118] sm:$0xff]
        %v338 = vld [vmem:[%s244 + $0x120] sm:$0xff]
        %v339 = vld [vmem:[%s244 + $0x128] sm:$0xff]
        %v340 = vld [vmem:[%s244 + $0x130] sm:$0xff]
        %v341 = vld [vmem:[%s244 + $0x138] sm:$0xff]
        %v342 = vld [vmem:[%s244 + $0x140] sm:$0xff]
        %v343 = vld [vmem:[%s244 + $0x148] sm:$0xff]
        %v344 = vld [vmem:[%s244 + $0x150] sm:$0xff]
        %v345 = vld [vmem:[%s244 + $0x158] sm:$0xff]
        %v346 = vld [vmem:[%s244 + $0x160] sm:$0xff]
        %v347 = vld [vmem:[%s244 + $0x168] sm:$0xff]
        %v348 = vld [vmem:[%s244 + $0x170] sm:$0xff]
        %v349 = vld [vmem:[%s244 + $0x178] sm:$0xff]
        %v350 = vld [vmem:[%s253] sm:$0xff]
        %v351 = vld [vmem:[%s253 + $0x8] sm:$0xff]
        %v352 = vld [vmem:[%s253 + $0x10] sm:$0xff]
        %v353 = vld [vmem:[%s253 + $0x18] sm:$0xff]
        %v354 = vld [vmem:[%s253 + $0x20] sm:$0xff]
        %v355 = vld [vmem:[%s253 + $0x28] sm:$0xff]
        %v356 = vld [vmem:[%s253 + $0x30] sm:$0xff]
        %v357 = vld [vmem:[%s253 + $0x38] sm:$0xff]
        %v358 = vld [vmem:[%s253 + $0x40] sm:$0xff]
        %v359 = vld [vmem:[%s253 + $0x48] sm:$0xff]
        %v360 = vld [vmem:[%s253 + $0x50] sm:$0xff]
        %v361 = vld [vmem:[%s253 + $0x58] sm:$0xff]
        %v362 = vld [vmem:[%s253 + $0x60] sm:$0xff]
        %v363 = vld [vmem:[%s253 + $0x68] sm:$0xff]
        %v364 = vld [vmem:[%s253 + $0x70] sm:$0xff]
        %v365 = vld [vmem:[%s253 + $0x78] sm:$0xff]
        %v366 = vld [vmem:[%s253 + $0x80] sm:$0xff]
        %v367 = vld [vmem:[%s253 + $0x88] sm:$0xff]
        %v368 = vld [vmem:[%s253 + $0x90] sm:$0xff]
        %v369 = vld [vmem:[%s253 + $0x98] sm:$0xff]
        %v370 = vld [vmem:[%s253 + $0xa0] sm:$0xff]
        %v371 = vld [vmem:[%s253 + $0xa8] sm:$0xff]
        %v372 = vld [vmem:[%s253 + $0xb0] sm:$0xff]
        %v373 = vld [vmem:[%s253 + $0xb8] sm:$0xff]
        %v374 = vld [vmem:[%s253 + $0xc0] sm:$0xff]
        %v375 = vld [vmem:[%s253 + $0xc8] sm:$0xff]
        %v376 = vld [vmem:[%s253 + $0xd0] sm:$0xff]
        %v377 = vld [vmem:[%s253 + $0xd8] sm:$0xff]
        %v378 = vld [vmem:[%s253 + $0xe0] sm:$0xff]
        %v379 = vld [vmem:[%s253 + $0xe8] sm:$0xff]
        %v380 = vld [vmem:[%s253 + $0xf0] sm:$0xff]
        %v381 = vld [vmem:[%s253 + $0xf8] sm:$0xff]
        %v382 = vld [vmem:[%s253 + $0x100] sm:$0xff]
        %v383 = vld [vmem:[%s253 + $0x108] sm:$0xff]
        %v384 = vld [vmem:[%s253 + $0x110] sm:$0xff]
        %v385 = vld [vmem:[%s253 + $0x118] sm:$0xff]
        %v386 = vld [vmem:[%s253 + $0x120] sm:$0xff]
        %v387 = vld [vmem:[%s253 + $0x128] sm:$0xff]
        %v388 = vld [vmem:[%s253 + $0x130] sm:$0xff]
        %v389 = vld [vmem:[%s253 + $0x138] sm:$0xff]
        %v390 = vld [vmem:[%s253 + $0x140] sm:$0xff]
        %v391 = vld [vmem:[%s253 + $0x148] sm:$0xff]
        %v392 = vld [vmem:[%s253 + $0x150] sm:$0xff]
        %v393 = vld [vmem:[%s253 + $0x158] sm:$0xff]
        %v394 = vld [vmem:[%s253 + $0x160] sm:$0xff]
        %v395 = vld [vmem:[%s253 + $0x168] sm:$0xff]
        %v396 = vld [vmem:[%s253 + $0x170] sm:$0xff]
        %v397 = vld [vmem:[%s253 + $0x178] sm:$0xff]
        %v398 = vld [vmem:[%s253 + $0x180] sm:$0xff]
        %v399 = vld [vmem:[%s253 + $0x188] sm:$0xff]
        %v400 = vld [vmem:[%s253 + $0x190] sm:$0xff]
        %v401 = vld [vmem:[%s253 + $0x198] sm:$0xff]
        %v402 = vld [vmem:[%s253 + $0x1a0] sm:$0xff]
        %v403 = vld [vmem:[%s253 + $0x1a8] sm:$0xff]
        %v404 = vld [vmem:[%s253 + $0x1b0] sm:$0xff]
        %v405 = vld [vmem:[%s253 + $0x1b8] sm:$0xff]
        %v406 = vld [vmem:[%s253 + $0x1c0] sm:$0xff]
        %v407 = vld [vmem:[%s253 + $0x1c8] sm:$0xff]
        %v408 = vld [vmem:[%s253 + $0x1d0] sm:$0xff]
        %v409 = vld [vmem:[%s253 + $0x1d8] sm:$0xff]
        %v410 = vld [vmem:[%s253 + $0x1e0] sm:$0xff]
        %v411 = vld [vmem:[%s253 + $0x1e8] sm:$0xff]
        %v412 = vld [vmem:[%s253 + $0x1f0] sm:$0xff]
        %v413 = vld [vmem:[%s253 + $0x1f8] sm:$0xff]
        %v414 = vld [vmem:[%s253 + $0x200] sm:$0xff]
        %v415 = vld [vmem:[%s253 + $0x208] sm:$0xff]
        %v416 = vld [vmem:[%s253 + $0x210] sm:$0xff]
        %v417 = vld [vmem:[%s253 + $0x218] sm:$0xff]
        %v418 = vld [vmem:[%s253 + $0x220] sm:$0xff]
        %v419 = vld [vmem:[%s253 + $0x228] sm:$0xff]
        %v420 = vld [vmem:[%s253 + $0x230] sm:$0xff]
        %v421 = vld [vmem:[%s253 + $0x238] sm:$0xff]
        %v422 = vld [vmem:[%s253 + $0x240] sm:$0xff]
        %v423 = vld [vmem:[%s253 + $0x248] sm:$0xff]
        %v424 = vld [vmem:[%s253 + $0x250] sm:$0xff]
        %v425 = vld [vmem:[%s253 + $0x258] sm:$0xff]
        %v426 = vld [vmem:[%s253 + $0x260] sm:$0xff]
        %v427 = vld [vmem:[%s253 + $0x268] sm:$0xff]
        %v428 = vld [vmem:[%s253 + $0x270] sm:$0xff]
        %v429 = vld [vmem:[%s253 + $0x278] sm:$0xff]
        %v430 = vld [vmem:[%s253 + $0x280] sm:$0xff]
        %v431 = vld [vmem:[%s253 + $0x288] sm:$0xff]
        %v432 = vld [vmem:[%s253 + $0x290] sm:$0xff]
        %v433 = vld [vmem:[%s253 + $0x298] sm:$0xff]
        %v434 = vld [vmem:[%s253 + $0x2a0] sm:$0xff]
        %v435 = vld [vmem:[%s253 + $0x2a8] sm:$0xff]
        %v436 = vld [vmem:[%s253 + $0x2b0] sm:$0xff]
        %v437 = vld [vmem:[%s253 + $0x2b8] sm:$0xff]
        %v438 = vld [vmem:[%s253 + $0x2c0] sm:$0xff]
        %v439 = vld [vmem:[%s253 + $0x2c8] sm:$0xff]
        %v440 = vld [vmem:[%s253 + $0x2d0] sm:$0xff]
        %v441 = vld [vmem:[%s253 + $0x2d8] sm:$0xff]
        %v442 = vld [vmem:[%s253 + $0x2e0] sm:$0xff]
        %v443 = vld [vmem:[%s253 + $0x2e8] sm:$0xff]
        %v444 = vld [vmem:[%s253 + $0x2f0] sm:$0xff]
        %v445 = vld [vmem:[%s253 + $0x2f8] sm:$0xff]
        %446 = vmatprep.subr.mxu0 %v351
        %447 = vmatpush1.msra.mxu0 %v350
        %448 = vmatprep.subr.mxu0 %v353
        %449 = vmatpush1.msra.mxu0 %v352
        %450 = vmatprep.subr.mxu0 %v355
        %451 = vmatpush1.msra.mxu0 %v354
        %452 = vmatprep.subr.mxu0 %v357
        %453 = vmatpush1.msra.mxu0 %v356
        %454 = vmatprep.subr.mxu0 %v359
        %455 = vmatpush1.msra.mxu0 %v358
        %456 = vmatprep.subr.mxu0 %v361
        %457 = vmatpush1.msra.mxu0 %v360
        %458 = vmatprep.subr.mxu0 %v363
        %459 = vmatpush1.msra.mxu0 %v362
        %460 = vmatprep.subr.mxu0 %v365
        %461 = vmatpush1.msra.mxu0 %v364
        %462 = vmatprep.subr.mxu0 %v367
        %463 = vmatpush1.msra.mxu0 %v366
        %464 = vmatprep.subr.mxu0 %v369
        %465 = vmatpush1.msra.mxu0 %v368
        %466 = vmatprep.subr.mxu0 %v371
        %467 = vmatpush1.msra.mxu0 %v370
        %468 = vmatprep.subr.mxu0 %v373
        %469 = vmatpush1.msra.mxu0 %v372
        %470 = vmatprep.subr.mxu0 %v375
        %471 = vmatpush1.msra.mxu0 %v374
        %472 = vmatprep.subr.mxu0 %v377
        %473 = vmatpush1.msra.mxu0 %v376
        %474 = vmatprep.subr.mxu0 %v379
        %475 = vmatpush1.msra.mxu0 %v378
        %476 = vmatprep.subr.mxu0 %v381
        %477 = vmatpush1.msra.mxu0 %v380
        %478 = vmatprep.subr.mxu0 %v383
        %479 = vmatpush1.msra.mxu0 %v382
        %480 = vmatprep.subr.mxu0 %v385
        %481 = vmatpush1.msra.mxu0 %v384
        %482 = vmatprep.subr.mxu0 %v387
        %483 = vmatpush1.msra.mxu0 %v386
        %484 = vmatprep.subr.mxu0 %v389
        %485 = vmatpush1.msra.mxu0 %v388
        %486 = vmatprep.subr.mxu0 %v391
        %487 = vmatpush1.msra.mxu0 %v390
        %488 = vmatprep.subr.mxu0 %v393
        %489 = vmatpush1.msra.mxu0 %v392
        %490 = vmatprep.subr.mxu0 %v395
        %491 = vmatpush1.msra.mxu0 %v394
        %492 = vmatprep.subr.mxu0 %v397
        %493 = vmatpush1.msra.mxu0 %v396
        %494 = vmatprep.subr.mxu0 %v399
        %495 = vmatpush1.msra.mxu0 %v398
        %496 = vmatprep.subr.mxu0 %v401
        %497 = vmatpush1.msra.mxu0 %v400
        %498 = vmatprep.subr.mxu0 %v403
        %499 = vmatpush1.msra.mxu0 %v402
        %500 = vmatprep.subr.mxu0 %v405
        %501 = vmatpush1.msra.mxu0 %v404
        %502 = vmatprep.subr.mxu0 %v407
        %503 = vmatpush1.msra.mxu0 %v406
        %504 = vmatprep.subr.mxu0 %v409
        %505 = vmatpush1.msra.mxu0 %v408
        %506 = vmatprep.subr.mxu0 %v411
        %507 = vmatpush1.msra.mxu0 %v410
        %508 = vmatprep.subr.mxu0 %v413
        %509 = vmatpush1.msra.mxu0 %v412
        %510 = vmatprep.mubr.f32.mxu0 %v303
        %511 = vmatmul.mubr.f32.gmra.mrb[0].mxu0 %v302
        %v512 = vpop.f32.mrb[0].mxu0
        %v513 = vadd.f32 0.0, %v512
        %v514 = vpop.f32.mrb[0].mxu0
        %v515 = vadd.f32 0.0, %v514
        %516 = vmatprep.mubr.f32.mxu0 %v306
        %517 = vmatmul.mubr.f32.gmra.mrb[0].mxu0 %v305
        %v518 = vpop.f32.mrb[0].mxu0
        %v519 = vadd.f32 0.0, %v518
        %v520 = vpop.f32.mrb[0].mxu0
        %v521 = vadd.f32 0.0, %v520
        %522 = vmatprep.mubr.f32.mxu0 %v309
        %523 = vmatmul.mubr.f32.gmra.mrb[0].mxu0 %v308
        %v524 = vpop.f32.mrb[0].mxu0
        %v525 = vadd.f32 0.0, %v524
        %v526 = vpop.f32.mrb[0].mxu0
        %v527 = vadd.f32 0.0, %v526
        %528 = vmatprep.mubr.f32.mxu0 %v312
        %529 = vmatmul.mubr.f32.gmra.mrb[0].mxu0 %v311
        %v530 = vpop.f32.mrb[0].mxu0
        %v531 = vadd.f32 0.0, %v530
        %v532 = vpop.f32.mrb[0].mxu0
        %v533 = vadd.f32 0.0, %v532
        %534 = vmatprep.mubr.f32.mxu0 %v315
        %535 = vmatmul.mubr.f32.gmra.mrb[0].mxu0 %v314
        %v536 = vpop.f32.mrb[0].mxu0
        %v537 = vadd.f32 0.0, %v536
        %v538 = vpop.f32.mrb[0].mxu0
        %v539 = vadd.f32 0.0, %v538
        %540 = vmatprep.mubr.f32.mxu0 %v318
        %541 = vmatmul.mubr.f32.gmra.mrb[0].mxu0 %v317
        %v542 = vpop.f32.mrb[0].mxu0
        %v543 = vadd.f32 0.0, %v542
        %v544 = vpop.f32.mrb[0].mxu0
        %v545 = vadd.f32 0.0, %v544
        %546 = vmatprep.mubr.f32.mxu0 %v321
        %547 = vmatmul.mubr.f32.gmra.mrb[0].mxu0 %v320
        %v548 = vpop.f32.mrb[0].mxu0
        %v549 = vadd.f32 0.0, %v548
        %v550 = vpop.f32.mrb[0].mxu0
        %v551 = vadd.f32 0.0, %v550
        %552 = vmatprep.mubr.f32.mxu0 %v324
        %553 = vmatmul.mubr.f32.gmra.mrb[0].mxu0 %v323
        %v554 = vpop.f32.mrb[0].mxu0
        %v555 = vadd.f32 0.0, %v554
        %v556 = vpop.f32.mrb[0].mxu0
        %v557 = vadd.f32 0.0, %v556
        %558 = vmatprep.mubr.f32.mxu0 %v327
        %559 = vmatmul.mubr.f32.gmra.mrb[0].mxu0 %v326
        %v560 = vpop.f32.mrb[0].mxu0
        %v561 = vadd.f32 0.0, %v560
        %v562 = vpop.f32.mrb[0].mxu0
        %v563 = vadd.f32 0.0, %v562
        %564 = vmatprep.mubr.f32.mxu0 %v330
        %565 = vmatmul.mubr.f32.gmra.mrb[0].mxu0 %v329
        %v566 = vpop.f32.mrb[0].mxu0
        %v567 = vadd.f32 0.0, %v566
        %v568 = vpop.f32.mrb[0].mxu0
        %v569 = vadd.f32 0.0, %v568
        %570 = vmatprep.mubr.f32.mxu0 %v333
        %571 = vmatmul.mubr.f32.gmra.mrb[0].mxu0 %v332
        %v572 = vpop.f32.mrb[0].mxu0
        %v573 = vadd.f32 0.0, %v572
        %v574 = vpop.f32.mrb[0].mxu0
        %v575 = vadd.f32 0.0, %v574
        %576 = vmatprep.mubr.f32.mxu0 %v336
        %577 = vmatmul.mubr.f32.gmra.mrb[0].mxu0 %v335
        %v578 = vpop.f32.mrb[0].mxu0
        %v579 = vadd.f32 0.0, %v578
        %v580 = vpop.f32.mrb[0].mxu0
        %v581 = vadd.f32 0.0, %v580
        %582 = vmatprep.mubr.f32.mxu0 %v339
        %583 = vmatmul.mubr.f32.gmra.mrb[0].mxu0 %v338
        %v584 = vpop.f32.mrb[0].mxu0
        %v585 = vadd.f32 0.0, %v584
        %v586 = vpop.f32.mrb[0].mxu0
        %v587 = vadd.f32 0.0, %v586
        %588 = vmatprep.mubr.f32.mxu0 %v342
        %589 = vmatmul.mubr.f32.gmra.mrb[0].mxu0 %v341
        %v590 = vpop.f32.mrb[0].mxu0
        %v591 = vadd.f32 0.0, %v590
        %v592 = vpop.f32.mrb[0].mxu0
        %v593 = vadd.f32 0.0, %v592
        %594 = vmatprep.mubr.f32.mxu0 %v345
        %595 = vmatmul.mubr.f32.gmra.mrb[0].mxu0 %v344
        %v596 = vpop.f32.mrb[0].mxu0
        %v597 = vadd.f32 0.0, %v596
        %v598 = vpop.f32.mrb[0].mxu0
        %v599 = vadd.f32 0.0, %v598
        %600 = vmatprep.mubr.f32.mxu0 %v348
        %601 = vmatmul.mubr.f32.gmra.mrb[0].mxu0 %v347
        %v602 = vpop.f32.mrb[0].mxu0
        %v603 = vadd.f32 0.0, %v602
        %v604 = vpop.f32.mrb[0].mxu0
        %v605 = vadd.f32 0.0, %v604
        %606 = vdwg.mxu0
        %607 = vmatprep.subr.mxu0 %v415
        %608 = vmatpush1.msra.mxu0 %v414
        %609 = vmatprep.subr.mxu0 %v417
        %610 = vmatpush1.msra.mxu0 %v416
        %611 = vmatprep.subr.mxu0 %v419
        %612 = vmatpush1.msra.mxu0 %v418
        %613 = vmatprep.subr.mxu0 %v421
        %614 = vmatpush1.msra.mxu0 %v420
        %615 = vmatprep.subr.mxu0 %v423
        %616 = vmatpush1.msra.mxu0 %v422
        %617 = vmatprep.subr.mxu0 %v425
        %618 = vmatpush1.msra.mxu0 %v424
        %619 = vmatprep.subr.mxu0 %v427
        %620 = vmatpush1.msra.mxu0 %v426
        %621 = vmatprep.subr.mxu0 %v429
        %622 = vmatpush1.msra.mxu0 %v428
        %623 = vmatprep.subr.mxu0 %v431
        %624 = vmatpush1.msra.mxu0 %v430
        %625 = vmatprep.subr.mxu0 %v433
        %626 = vmatpush1.msra.mxu0 %v432
        %627 = vmatprep.subr.mxu0 %v435
        %628 = vmatpush1.msra.mxu0 %v434
        %629 = vmatprep.subr.mxu0 %v437
        %630 = vmatpush1.msra.mxu0 %v436
        %631 = vmatprep.subr.mxu0 %v439
        %632 = vmatpush1.msra.mxu0 %v438
        %633 = vmatprep.subr.mxu0 %v441
        %634 = vmatpush1.msra.mxu0 %v440
        %635 = vmatprep.subr.mxu0 %v443
        %636 = vmatpush1.msra.mxu0 %v442
        %637 = vmatprep.subr.mxu0 %v445
        %638 = vmatpush1.msra.mxu0 %v444
        %639 = vmatprep.subr.mxu0 0.0
        %640 = vmatpush1.msra.mxu0 0.0
        %641 = vmatprep.subr.mxu0 0.0
        %642 = vmatpush1.msra.mxu0 0.0
        %643 = vmatprep.subr.mxu0 0.0
        %644 = vmatpush1.msra.mxu0 0.0
        %645 = vmatprep.subr.mxu0 0.0
        %646 = vmatpush1.msra.mxu0 0.0
        %647 = vmatprep.subr.mxu0 0.0
        %648 = vmatpush1.msra.mxu0 0.0
        %649 = vmatprep.subr.mxu0 0.0
        %650 = vmatpush1.msra.mxu0 0.0
        %651 = vmatprep.subr.mxu0 0.0
        %652 = vmatpush1.msra.mxu0 0.0
        %653 = vmatprep.subr.mxu0 0.0
        %654 = vmatpush1.msra.mxu0 0.0
        %655 = vmatprep.subr.mxu0 0.0
        %656 = vmatpush1.msra.mxu0 0.0
        %657 = vmatprep.subr.mxu0 0.0
        %658 = vmatpush1.msra.mxu0 0.0
        %659 = vmatprep.subr.mxu0 0.0
        %660 = vmatpush1.msra.mxu0 0.0
        %661 = vmatprep.subr.mxu0 0.0
        %662 = vmatpush1.msra.mxu0 0.0
        %663 = vmatprep.subr.mxu0 0.0
        %664 = vmatpush1.msra.mxu0 0.0
        %665 = vmatprep.subr.mxu0 0.0
        %666 = vmatpush1.msra.mxu0 0.0
        %667 = vmatprep.subr.mxu0 0.0
        %668 = vmatpush1.msra.mxu0 0.0
        %669 = vmatprep.subr.mxu0 0.0
        %670 = vmatpush1.msra.mxu0 0.0
        %671 = vmatprep.mubr.f32.mxu0 0.0
        %672 = vmatmul.mubr.f32.gmra.mrb[0].mxu0 %v304
        %v673 = vpop.f32.mrb[0].mxu0
        %v674 = vadd.f32 %v513, %v673
        %v675 = vpop.f32.mrb[0].mxu0
        %v676 = vadd.f32 %v515, %v675
        %677 = vmatprep.mubr.f32.mxu0 0.0
        %678 = vmatmul.mubr.f32.gmra.mrb[0].mxu0 %v307
        %v679 = vpop.f32.mrb[0].mxu0
        %v680 = vadd.f32 %v519, %v679
        %v681 = vpop.f32.mrb[0].mxu0
        %v682 = vadd.f32 %v521, %v681
        %683 = vmatprep.mubr.f32.mxu0 0.0
        %684 = vmatmul.mubr.f32.gmra.mrb[0].mxu0 %v310
        %v685 = vpop.f32.mrb[0].mxu0
        %v686 = vadd.f32 %v525, %v685
        %v687 = vpop.f32.mrb[0].mxu0
        %v688 = vadd.f32 %v527, %v687
        %689 = vmatprep.mubr.f32.mxu0 0.0
        %690 = vmatmul.mubr.f32.gmra.mrb[0].mxu0 %v313
        %v691 = vpop.f32.mrb[0].mxu0
        %v692 = vadd.f32 %v531, %v691
        %v693 = vpop.f32.mrb[0].mxu0
        %v694 = vadd.f32 %v533, %v693
        %695 = vmatprep.mubr.f32.mxu0 0.0
        %696 = vmatmul.mubr.f32.gmra.mrb[0].mxu0 %v316
        %v697 = vpop.f32.mrb[0].mxu0
        %v698 = vadd.f32 %v537, %v697
        %v699 = vpop.f32.mrb[0].mxu0
        %v700 = vadd.f32 %v539, %v699
        %701 = vmatprep.mubr.f32.mxu0 0.0
        %702 = vmatmul.mubr.f32.gmra.mrb[0].mxu0 %v319
        %v703 = vpop.f32.mrb[0].mxu0
        %v704 = vadd.f32 %v543, %v703
        %v705 = vpop.f32.mrb[0].mxu0
        %v706 = vadd.f32 %v545, %v705
        %707 = vmatprep.mubr.f32.mxu0 0.0
        %708 = vmatmul.mubr.f32.gmra.mrb[0].mxu0 %v322
        %v709 = vpop.f32.mrb[0].mxu0
        %v710 = vadd.f32 %v549, %v709
        %v711 = vpop.f32.mrb[0].mxu0
        %v712 = vadd.f32 %v551, %v711
        %713 = vmatprep.mubr.f32.mxu0 0.0
        %714 = vmatmul.mubr.f32.gmra.mrb[0].mxu0 %v325
        %v715 = vpop.f32.mrb[0].mxu0
        %v716 = vadd.f32 %v555, %v715
        %v717 = vpop.f32.mrb[0].mxu0
        %v718 = vadd.f32 %v557, %v717
        %719 = vmatprep.mubr.f32.mxu0 0.0
        %720 = vmatmul.mubr.f32.gmra.mrb[0].mxu0 %v328
        %v721 = vpop.f32.mrb[0].mxu0
        %v722 = vadd.f32 %v561, %v721
        %v723 = vpop.f32.mrb[0].mxu0
        %v724 = vadd.f32 %v563, %v723
        %725 = vmatprep.mubr.f32.mxu0 0.0
        %726 = vmatmul.mubr.f32.gmra.mrb[0].mxu0 %v331
        %v727 = vpop.f32.mrb[0].mxu0
        %v728 = vadd.f32 %v567, %v727
        %v729 = vpop.f32.mrb[0].mxu0
        %v730 = vadd.f32 %v569, %v729
        %731 = vmatprep.mubr.f32.mxu0 0.0
        %732 = vmatmul.mubr.f32.gmra.mrb[0].mxu0 %v334
        %v733 = vpop.f32.mrb[0].mxu0
        %v734 = vadd.f32 %v573, %v733
        %v735 = vpop.f32.mrb[0].mxu0
        %v736 = vadd.f32 %v575, %v735
        %737 = vmatprep.mubr.f32.mxu0 0.0
        %738 = vmatmul.mubr.f32.gmra.mrb[0].mxu0 %v337
        %v739 = vpop.f32.mrb[0].mxu0
        %v740 = vadd.f32 %v579, %v739
        %v741 = vpop.f32.mrb[0].mxu0
        %v742 = vadd.f32 %v581, %v741
        %743 = vmatprep.mubr.f32.mxu0 0.0
        %744 = vmatmul.mubr.f32.gmra.mrb[0].mxu0 %v340
        %v745 = vpop.f32.mrb[0].mxu0
        %v746 = vadd.f32 %v585, %v745
        %v747 = vpop.f32.mrb[0].mxu0
        %v748 = vadd.f32 %v587, %v747
        %749 = vmatprep.mubr.f32.mxu0 0.0
        %750 = vmatmul.mubr.f32.gmra.mrb[0].mxu0 %v343
        %v751 = vpop.f32.mrb[0].mxu0
        %v752 = vadd.f32 %v591, %v751
        %v753 = vpop.f32.mrb[0].mxu0
        %v754 = vadd.f32 %v593, %v753
        %755 = vmatprep.mubr.f32.mxu0 0.0
        %756 = vmatmul.mubr.f32.gmra.mrb[0].mxu0 %v346
        %v757 = vpop.f32.mrb[0].mxu0
        %v758 = vadd.f32 %v597, %v757
        %v759 = vpop.f32.mrb[0].mxu0
        %v760 = vadd.f32 %v599, %v759
        %761 = vmatprep.mubr.f32.mxu0 0.0
        %762 = vmatmul.mubr.f32.gmra.mrb[0].mxu0 %v349
        %v763 = vpop.f32.mrb[0].mxu0
        %v764 = vadd.f32 %v603, %v763
        %v765 = vpop.f32.mrb[0].mxu0
        %v766 = vadd.f32 %v605, %v765
        %767 = vdwg.mxu0
        %p768 = scmp.eq.s32.totalorder %s30, 0
        // Predicated region
        $region45: #{tpu_custom_call.1} parent=31 // pred_check
          %p769 = pneg %p768
        $region46: #{tpu_custom_call.1} parent=31 // pred_check_branch
          %771 = sbr.rel (%p769) target = $region48
        $region47: #{tpu_custom_call.1} parent=31 // pred_region
          %772 = vst [vmem:[#allocation2] sm:$0xff] %v674
          %773 = vst [vmem:[#allocation2 + $0x8] sm:$0xff] %v676
          %774 = vst [vmem:[#allocation2 + $0x10] sm:$0xff] %v680
          %775 = vst [vmem:[#allocation2 + $0x18] sm:$0xff] %v682
          %776 = vst [vmem:[#allocation2 + $0x20] sm:$0xff] %v686
          %777 = vst [vmem:[#allocation2 + $0x28] sm:$0xff] %v688
          %778 = vst [vmem:[#allocation2 + $0x30] sm:$0xff] %v692
          %779 = vst [vmem:[#allocation2 + $0x38] sm:$0xff] %v694
          %780 = vst [vmem:[#allocation2 + $0x40] sm:$0xff] %v698
          %781 = vst [vmem:[#allocation2 + $0x48] sm:$0xff] %v700
          %782 = vst [vmem:[#allocation2 + $0x50] sm:$0xff] %v704
          %783 = vst [vmem:[#allocation2 + $0x58] sm:$0xff] %v706
          %784 = vst [vmem:[#allocation2 + $0x60] sm:$0xff] %v710
          %785 = vst [vmem:[#allocation2 + $0x68] sm:$0xff] %v712
          %786 = vst [vmem:[#allocation2 + $0x70] sm:$0xff] %v716
          %787 = vst [vmem:[#allocation2 + $0x78] sm:$0xff] %v718
          %788 = vst [vmem:[#allocation2 + $0x80] sm:$0xff] %v722
          %789 = vst [vmem:[#allocation2 + $0x88] sm:$0xff] %v724
          %790 = vst [vmem:[#allocation2 + $0x90] sm:$0xff] %v728
          %791 = vst [vmem:[#allocation2 + $0x98] sm:$0xff] %v730
          %792 = vst [vmem:[#allocation2 + $0xa0] sm:$0xff] %v734
          %793 = vst [vmem:[#allocation2 + $0xa8] sm:$0xff] %v736
          %794 = vst [vmem:[#allocation2 + $0xb0] sm:$0xff] %v740
          %795 = vst [vmem:[#allocation2 + $0xb8] sm:$0xff] %v742
          %796 = vst [vmem:[#allocation2 + $0xc0] sm:$0xff] %v746
          %797 = vst [vmem:[#allocation2 + $0xc8] sm:$0xff] %v748
          %798 = vst [vmem:[#allocation2 + $0xd0] sm:$0xff] %v752
          %799 = vst [vmem:[#allocation2 + $0xd8] sm:$0xff] %v754
          %800 = vst [vmem:[#allocation2 + $0xe0] sm:$0xff] %v758
          %801 = vst [vmem:[#allocation2 + $0xe8] sm:$0xff] %v760
          %802 = vst [vmem:[#allocation2 + $0xf0] sm:$0xff] %v764
          %803 = vst [vmem:[#allocation2 + $0xf8] sm:$0xff] %v766
        $region48: #{tpu_custom_call.1} parent=31 // pred_fallthru
          _
        %p804 = scmp.gt.s32.totalorder %s30, 0
        // Predicated region
        $region49: #{tpu_custom_call.1} parent=31 // pred_check
          %p805 = pneg %p804
        $region50: #{tpu_custom_call.1} parent=31 // pred_check_branch
          %807 = sbr.rel (%p805) target = $region52
        $region51: #{tpu_custom_call.1} parent=31 // pred_region
          %v808 = vld [vmem:[#allocation2] sm:$0xff]
          %v809 = vld [vmem:[#allocation2 + $0x8] sm:$0xff]
          %v810 = vld [vmem:[#allocation2 + $0x10] sm:$0xff]
          %v811 = vld [vmem:[#allocation2 + $0x18] sm:$0xff]
          %v812 = vld [vmem:[#allocation2 + $0x20] sm:$0xff]
          %v813 = vld [vmem:[#allocation2 + $0x28] sm:$0xff]
          %v814 = vld [vmem:[#allocation2 + $0x30] sm:$0xff]
          %v815 = vld [vmem:[#allocation2 + $0x38] sm:$0xff]
          %v816 = vld [vmem:[#allocation2 + $0x40] sm:$0xff]
          %v817 = vld [vmem:[#allocation2 + $0x48] sm:$0xff]
          %v818 = vld [vmem:[#allocation2 + $0x50] sm:$0xff]
          %v819 = vld [vmem:[#allocation2 + $0x58] sm:$0xff]
          %v820 = vld [vmem:[#allocation2 + $0x60] sm:$0xff]
          %v821 = vld [vmem:[#allocation2 + $0x68] sm:$0xff]
          %v822 = vld [vmem:[#allocation2 + $0x70] sm:$0xff]
          %v823 = vld [vmem:[#allocation2 + $0x78] sm:$0xff]
          %v824 = vld [vmem:[#allocation2 + $0x80] sm:$0xff]
          %v825 = vld [vmem:[#allocation2 + $0x88] sm:$0xff]
          %v826 = vld [vmem:[#allocation2 + $0x90] sm:$0xff]
          %v827 = vld [vmem:[#allocation2 + $0x98] sm:$0xff]
          %v828 = vld [vmem:[#allocation2 + $0xa0] sm:$0xff]
          %v829 = vld [vmem:[#allocation2 + $0xa8] sm:$0xff]
          %v830 = vld [vmem:[#allocation2 + $0xb0] sm:$0xff]
          %v831 = vld [vmem:[#allocation2 + $0xb8] sm:$0xff]
          %v832 = vld [vmem:[#allocation2 + $0xc0] sm:$0xff]
          %v833 = vld [vmem:[#allocation2 + $0xc8] sm:$0xff]
          %v834 = vld [vmem:[#allocation2 + $0xd0] sm:$0xff]
          %v835 = vld [vmem:[#allocation2 + $0xd8] sm:$0xff]
          %v836 = vld [vmem:[#allocation2 + $0xe0] sm:$0xff]
          %v837 = vld [vmem:[#allocation2 + $0xe8] sm:$0xff]
          %v838 = vld [vmem:[#allocation2 + $0xf0] sm:$0xff]
          %v839 = vld [vmem:[#allocation2 + $0xf8] sm:$0xff]
          %v840 = vadd.f32 %v808, %v674
          %v841 = vadd.f32 %v809, %v676
          %v842 = vadd.f32 %v810, %v680
          %v843 = vadd.f32 %v811, %v682
          %v844 = vadd.f32 %v812, %v686
          %v845 = vadd.f32 %v813, %v688
          %v846 = vadd.f32 %v814, %v692
          %v847 = vadd.f32 %v815, %v694
          %v848 = vadd.f32 %v816, %v698
          %v849 = vadd.f32 %v817, %v700
          %v850 = vadd.f32 %v818, %v704
          %v851 = vadd.f32 %v819, %v706
          %v852 = vadd.f32 %v820, %v710
          %v853 = vadd.f32 %v821, %v712
          %v854 = vadd.f32 %v822, %v716
          %v855 = vadd.f32 %v823, %v718
          %v856 = vadd.f32 %v824, %v722
          %v857 = vadd.f32 %v825, %v724
          %v858 = vadd.f32 %v826, %v728
          %v859 = vadd.f32 %v827, %v730
          %v860 = vadd.f32 %v828, %v734
          %v861 = vadd.f32 %v829, %v736
          %v862 = vadd.f32 %v830, %v740
          %v863 = vadd.f32 %v831, %v742
          %v864 = vadd.f32 %v832, %v746
          %v865 = vadd.f32 %v833, %v748
          %v866 = vadd.f32 %v834, %v752
          %v867 = vadd.f32 %v835, %v754
          %v868 = vadd.f32 %v836, %v758
          %v869 = vadd.f32 %v837, %v760
          %v870 = vadd.f32 %v838, %v764
          %v871 = vadd.f32 %v839, %v766
          %872 = vst [vmem:[#allocation2] sm:$0xff] %v840
          %873 = vst [vmem:[#allocation2 + $0x8] sm:$0xff] %v841
          %874 = vst [vmem:[#allocation2 + $0x10] sm:$0xff] %v842
          %875 = vst [vmem:[#allocation2 + $0x18] sm:$0xff] %v843
          %876 = vst [vmem:[#allocation2 + $0x20] sm:$0xff] %v844
          %877 = vst [vmem:[#allocation2 + $0x28] sm:$0xff] %v845
          %878 = vst [vmem:[#allocation2 + $0x30] sm:$0xff] %v846
          %879 = vst [vmem:[#allocation2 + $0x38] sm:$0xff] %v847
          %880 = vst [vmem:[#allocation2 + $0x40] sm:$0xff] %v848
          %881 = vst [vmem:[#allocation2 + $0x48] sm:$0xff] %v849
          %882 = vst [vmem:[#allocation2 + $0x50] sm:$0xff] %v850
          %883 = vst [vmem:[#allocation2 + $0x58] sm:$0xff] %v851
          %884 = vst [vmem:[#allocation2 + $0x60] sm:$0xff] %v852
          %885 = vst [vmem:[#allocation2 + $0x68] sm:$0xff] %v853
          %886 = vst [vmem:[#allocation2 + $0x70] sm:$0xff] %v854
          %887 = vst [vmem:[#allocation2 + $0x78] sm:$0xff] %v855
          %888 = vst [vmem:[#allocation2 + $0x80] sm:$0xff] %v856
          %889 = vst [vmem:[#allocation2 + $0x88] sm:$0xff] %v857
          %890 = vst [vmem:[#allocation2 + $0x90] sm:$0xff] %v858
          %891 = vst [vmem:[#allocation2 + $0x98] sm:$0xff] %v859
          %892 = vst [vmem:[#allocation2 + $0xa0] sm:$0xff] %v860
          %893 = vst [vmem:[#allocation2 + $0xa8] sm:$0xff] %v861
          %894 = vst [vmem:[#allocation2 + $0xb0] sm:$0xff] %v862
          %895 = vst [vmem:[#allocation2 + $0xb8] sm:$0xff] %v863
          %896 = vst [vmem:[#allocation2 + $0xc0] sm:$0xff] %v864
          %897 = vst [vmem:[#allocation2 + $0xc8] sm:$0xff] %v865
          %898 = vst [vmem:[#allocation2 + $0xd0] sm:$0xff] %v866
          %899 = vst [vmem:[#allocation2 + $0xd8] sm:$0xff] %v867
          %900 = vst [vmem:[#allocation2 + $0xe0] sm:$0xff] %v868
          %901 = vst [vmem:[#allocation2 + $0xe8] sm:$0xff] %v869
          %902 = vst [vmem:[#allocation2 + $0xf0] sm:$0xff] %v870
          %903 = vst [vmem:[#allocation2 + $0xf8] sm:$0xff] %v871
        $region52: #{tpu_custom_call.1} parent=31 // pred_fallthru
          _
        %p904 = scmp.eq.s32.totalorder %s30, 1
        // Predicated region
        $region53: #{tpu_custom_call.1} parent=31 // pred_check
          %p905 = pneg %p904
        $region54: #{tpu_custom_call.1} parent=31 // pred_check_branch
          %907 = sbr.rel (%p905) target = $region56
        $region55: #{tpu_custom_call.1} parent=31 // pred_region
          %v908 = vld [vmem:[#allocation2] sm:$0xff]
          %v909 = vld [vmem:[#allocation2 + $0x8] sm:$0xff]
          %v910 = vld [vmem:[#allocation2 + $0x10] sm:$0xff]
          %v911 = vld [vmem:[#allocation2 + $0x18] sm:$0xff]
          %v912 = vld [vmem:[#allocation2 + $0x20] sm:$0xff]
          %v913 = vld [vmem:[#allocation2 + $0x28] sm:$0xff]
          %v914 = vld [vmem:[#allocation2 + $0x30] sm:$0xff]
          %v915 = vld [vmem:[#allocation2 + $0x38] sm:$0xff]
          %v916 = vld [vmem:[#allocation2 + $0x40] sm:$0xff]
          %v917 = vld [vmem:[#allocation2 + $0x48] sm:$0xff]
          %v918 = vld [vmem:[#allocation2 + $0x50] sm:$0xff]
          %v919 = vld [vmem:[#allocation2 + $0x58] sm:$0xff]
          %v920 = vld [vmem:[#allocation2 + $0x60] sm:$0xff]
          %v921 = vld [vmem:[#allocation2 + $0x68] sm:$0xff]
          %v922 = vld [vmem:[#allocation2 + $0x70] sm:$0xff]
          %v923 = vld [vmem:[#allocation2 + $0x78] sm:$0xff]
          %v924 = vld [vmem:[#allocation2 + $0x80] sm:$0xff]
          %v925 = vld [vmem:[#allocation2 + $0x88] sm:$0xff]
          %v926 = vld [vmem:[#allocation2 + $0x90] sm:$0xff]
          %v927 = vld [vmem:[#allocation2 + $0x98] sm:$0xff]
          %v928 = vld [vmem:[#allocation2 + $0xa0] sm:$0xff]
          %v929 = vld [vmem:[#allocation2 + $0xa8] sm:$0xff]
          %v930 = vld [vmem:[#allocation2 + $0xb0] sm:$0xff]
          %v931 = vld [vmem:[#allocation2 + $0xb8] sm:$0xff]
          %v932 = vld [vmem:[#allocation2 + $0xc0] sm:$0xff]
          %v933 = vld [vmem:[#allocation2 + $0xc8] sm:$0xff]
          %v934 = vld [vmem:[#allocation2 + $0xd0] sm:$0xff]
          %v935 = vld [vmem:[#allocation2 + $0xd8] sm:$0xff]
          %v936 = vld [vmem:[#allocation2 + $0xe0] sm:$0xff]
          %v937 = vld [vmem:[#allocation2 + $0xe8] sm:$0xff]
          %v938 = vld [vmem:[#allocation2 + $0xf0] sm:$0xff]
          %v939 = vld [vmem:[#allocation2 + $0xf8] sm:$0xff]
          %v940 = vld [vmem:[%s262] sm:$0x3]
          %v942 = vlaneseq
          %v943 = vshrl.u32 %v942, 7
          %v944 = vsub.s32 0, %v943
          %v945 = vrot.slane %v940, %v944
          %v946 = vlaneseq
          %v947 = vshrl.u32 %v946, 7
          %v948 = vsub.s32 1, %v947
          %v949 = vrot.slane %v940, %v948
          %v952 = vadd.f32 %v908, %v945
          %v953 = vadd.f32 %v909, %v949
          %v954 = vadd.f32 %v910, %v945
          %v955 = vadd.f32 %v911, %v949
          %v956 = vadd.f32 %v912, %v945
          %v957 = vadd.f32 %v913, %v949
          %v958 = vadd.f32 %v914, %v945
          %v959 = vadd.f32 %v915, %v949
          %v960 = vadd.f32 %v916, %v945
          %v961 = vadd.f32 %v917, %v949
          %v962 = vadd.f32 %v918, %v945
          %v963 = vadd.f32 %v919, %v949
          %v964 = vadd.f32 %v920, %v945
          %v965 = vadd.f32 %v921, %v949
          %v966 = vadd.f32 %v922, %v945
          %v967 = vadd.f32 %v923, %v949
          %v968 = vadd.f32 %v924, %v945
          %v969 = vadd.f32 %v925, %v949
          %v970 = vadd.f32 %v926, %v945
          %v971 = vadd.f32 %v927, %v949
          %v972 = vadd.f32 %v928, %v945
          %v973 = vadd.f32 %v929, %v949
          %v974 = vadd.f32 %v930, %v945
          %v975 = vadd.f32 %v931, %v949
          %v976 = vadd.f32 %v932, %v945
          %v977 = vadd.f32 %v933, %v949
          %v978 = vadd.f32 %v934, %v945
          %v979 = vadd.f32 %v935, %v949
          %v980 = vadd.f32 %v936, %v945
          %v981 = vadd.f32 %v937, %v949
          %v982 = vadd.f32 %v938, %v945
          %v983 = vadd.f32 %v939, %v949
          %984 = vst [vmem:[%s294] sm:$0xff] %v952
          %985 = vst [vmem:[%s294 + $0x8] sm:$0xff] %v953
          %986 = vst [vmem:[%s294 + $0x10] sm:$0xff] %v954
          %987 = vst [vmem:[%s294 + $0x18] sm:$0xff] %v955
          %988 = vst [vmem:[%s294 + $0x20] sm:$0xff] %v956
          %989 = vst [vmem:[%s294 + $0x28] sm:$0xff] %v957
          %990 = vst [vmem:[%s294 + $0x30] sm:$0xff] %v958
          %991 = vst [vmem:[%s294 + $0x38] sm:$0xff] %v959
          %992 = vst [vmem:[%s294 + $0x40] sm:$0xff] %v960
          %993 = vst [vmem:[%s294 + $0x48] sm:$0xff] %v961
          %994 = vst [vmem:[%s294 + $0x50] sm:$0xff] %v962
          %995 = vst [vmem:[%s294 + $0x58] sm:$0xff] %v963
          %996 = vst [vmem:[%s294 + $0x60] sm:$0xff] %v964
          %997 = vst [vmem:[%s294 + $0x68] sm:$0xff] %v965
          %998 = vst [vmem:[%s294 + $0x70] sm:$0xff] %v966
          %999 = vst [vmem:[%s294 + $0x78] sm:$0xff] %v967
          %1000 = vst [vmem:[%s294 + $0x80] sm:$0xff] %v968
          %1001 = vst [vmem:[%s294 + $0x88] sm:$0xff] %v969
          %1002 = vst [vmem:[%s294 + $0x90] sm:$0xff] %v970
          %1003 = vst [vmem:[%s294 + $0x98] sm:$0xff] %v971
          %1004 = vst [vmem:[%s294 + $0xa0] sm:$0xff] %v972
          %1005 = vst [vmem:[%s294 + $0xa8] sm:$0xff] %v973
          %1006 = vst [vmem:[%s294 + $0xb0] sm:$0xff] %v974
          %1007 = vst [vmem:[%s294 + $0xb8] sm:$0xff] %v975
          %1008 = vst [vmem:[%s294 + $0xc0] sm:$0xff] %v976
          %1009 = vst [vmem:[%s294 + $0xc8] sm:$0xff] %v977
          %1010 = vst [vmem:[%s294 + $0xd0] sm:$0xff] %v978
          %1011 = vst [vmem:[%s294 + $0xd8] sm:$0xff] %v979
          %1012 = vst [vmem:[%s294 + $0xe0] sm:$0xff] %v980
          %1013 = vst [vmem:[%s294 + $0xe8] sm:$0xff] %v981
          %1014 = vst [vmem:[%s294 + $0xf0] sm:$0xff] %v982
          %1015 = vst [vmem:[%s294 + $0xf8] sm:$0xff] %v983
        $region56: #{tpu_custom_call.1} parent=31 // pred_fallthru
          _
        %s1016 = sand.u32 %s134, 1
        %s1017 = scalar_lea.sflag [#allocation5], %s1016
        %s1018 = sand.u32 %s134, 1
        %s1019 = smul.addr %s1018, 256
        %s1020 = scalar_lea.vmem [#allocation9], %s1019
        // Predicated region
        $region57: #{tpu_custom_call.1} parent=31 // pred_check
          %p1021 = pneg %p144
        $region58: #{tpu_custom_call.1} parent=31 // pred_check_branch
          %1023 = sbr.rel (%p1021) target = $region60
        $region59: #{tpu_custom_call.1} parent=31 // pred_region
          %s1024 = smul.u32 16, %s28
          %s1025 = smul.u32 2, %s29
          %s1027 = ssub.s32 4096, 4096
          %1028 = vsyncadd %s1017, %s1027
          %s1029 = smul.addr %s1024, 4
          %s1030 = sadd.s32 %s1025, %s1029
          %s1031 = smul.addr %s1030, 128
          %s1032 = scalar_lea.hbm %s3, %s1031
          %s1033 = sshll.u32 %s1020, 4
          %s1034 = int_to_ptr.vmem [resolvable:$true] %s1033
          %1039 = dma.vmem_to_hbm [thread:$0]  %s1034, 4096, %s1032, %s1017, 256, 512, 16
        $region60: #{tpu_custom_call.1} parent=31 // pred_fallthru
          _
      $region32: #{tpu_custom_call.1} parent=5 // pred_fallthru
        _
      %p1040 = scmp.le.s32.totalorder 2, %s18
      // Predicated region
      $region61: #{tpu_custom_call.1} parent=5 // pred_check
        %p1041 = pneg %p1040
      $region62: #{tpu_custom_call.1} parent=5 // pred_check_branch
        %1043 = sbr.rel (%p1041) target = $region64
      $region63: #{tpu_custom_call.1} parent=5 // pred_region
        %s1044 = ssub.s32 %s18, 2
        // Predicated region
        $region65: #{tpu_custom_call.1} parent=63 // pred_check
          %p1045 = pneg %p150
        $region66: #{tpu_custom_call.1} parent=63 // pred_check_branch
          %1047 = sbr.rel (%p1045) target = $region68
        $region67: #{tpu_custom_call.1} parent=63 // pred_region
          %s1048 = sand.u32 %s135, 1
          %s1049 = scalar_lea.sflag [#allocation5], %s1048
          %s1050 = sand.u32 %s135, 1
          %s1051 = smul.addr %s1050, 256
          %s1052 = scalar_lea.vmem [#allocation9], %s1051
          %1053 = dma.done %s1049, 4096
        $region68: #{tpu_custom_call.1} parent=63 // pred_fallthru
          _
      $region64: #{tpu_custom_call.1} parent=5 // pred_fallthru
        _
    $region6: #{tpu_custom_call.1} parent=1 // loop_footer
      %s22 = sadd.s32 1, %s18
    $region7: #{tpu_custom_call.1} parent=1 // loop_footer_branch
      %17 = sbr.rel target = $region3
    $region8: #{tpu_custom_call.1} parent=1 // loop_exit
      _
    %1054 = vsyncpa [#allocation4], 1
    %s1055 = scalar_lea.sflag [#allocation4], 1
    %1056 = vsyncpa %s1055, 1
    %1057 = vsyncpa [#allocation7], 1
    %s1058 = scalar_lea.sflag [#allocation7], 1
    %1059 = vsyncpa %s1058, 1
    %1060 = vsyncpa [#allocation5], 1
    %s1061 = scalar_lea.sflag [#allocation5], 1
    %1062 = vsyncpa %s1061, 1

</llo_original>
